<compile_context>
chip_gen: v7x
topology: tpu7x:2x2x1
jax: 0.10.0
libtpu: 0.0.40
codegen_flags: <defaults>
</compile_context>

<pallas_src>
import functools

import jax
import jax.numpy as jnp
from jax.experimental import pallas as pl
from jax.experimental.pallas import tpu as pltpu

# Compartment index convention (stand-in for config.COMPARTMENT)
COMPARTMENT = {"S": 0, "E": 1, "I": 2, "Ie": 3, "R": 4, "S_N": 5}
NUM_COMPARTMENTS = len(COMPARTMENT)

LANES = 512          # lane-dense last dim (multiple of 128)
MAX_ROW_TILE = 512   # 512 * 512 * 4B = 1 MiB per operand per tile


def _seiier_kernel(bi_ref, bie_ref, sn_ref, i_ref, ie_ref, out_ref, *, p):
    # All refs: [row_tile, LANES] f32, fully lane-dense (unmasked vst).
    out_ref[...] = (
        sn_ref[...] * (bi_ref[...] * i_ref[...] + bie_ref[...] * ie_ref[...]) * p
    )


def seiier_forward(betaI, betaIe, prev_state, *, p, time_step):
    """Pallas implementation of epdemicSEIIeR.forward.

    Args:
      betaI:      [B, T, 1] float32
      betaIe:     [B, T, 1] float32
      prev_state: [B, T, C] float32 (C = NUM_COMPARTMENTS)
    Returns:
      prediction: [B, T] float32
    """
    B, T, _ = betaI.shape
    assert T == time_step

    # Slice only the compartments the formula needs (no full transpose).
    bi = betaI[..., 0]                              # [B, T]
    bie = betaIe[..., 0]                            # [B, T]
    sn = prev_state[..., COMPARTMENT["S_N"]]        # [B, T]
    i_ = prev_state[..., COMPARTMENT["I"]]          # [B, T]
    ie = prev_state[..., COMPARTMENT["Ie"]]         # [B, T]

    # Flatten B*T and re-tile into a lane-dense (rows, LANES) slab.
    n = B * T
    rows = pl.cdiv(n, LANES)
    if rows >= MAX_ROW_TILE:
        row_tile = MAX_ROW_TILE
    else:
        # Single grid step for small problems; keep sublane multiple of 8.
        row_tile = max(8, pl.cdiv(rows, 8) * 8)
    padded_rows = pl.cdiv(rows, row_tile) * row_tile
    padded_n = padded_rows * LANES
    grid = (padded_rows // row_tile,)

    def _prep(x):
        x = x.reshape(-1).astype(jnp.float32)
        if padded_n > n:
            x = jnp.pad(x, (0, padded_n - n))
        return x.reshape(padded_rows, LANES)

    args = [_prep(a) for a in (bi, bie, sn, i_, ie)]

    spec = pl.BlockSpec((row_tile, LANES), lambda r: (r, 0))

    out = pl.pallas_call(
        functools.partial(_seiier_kernel, p=float(p)),
        out_shape=jax.ShapeDtypeStruct((padded_rows, LANES), jnp.float32),
        grid_spec=pltpu.PrefetchScalarGridSpec(
            num_scalar_prefetch=0,
            grid=grid,
            in_specs=[spec] * 5,
            out_specs=spec,
        ),
        compiler_params=pltpu.CompilerParams(
            dimension_semantics=("parallel",),
            vmem_limit_bytes=48 << 20,  # 6 operands x 2 bufs x 1 MiB ~= 12 MiB
        ),
    )(*args)

    return out.reshape(-1)[:n].reshape(B, T)


def _reference(betaI, betaIe, prev_state, p):
    sn = prev_state[..., COMPARTMENT["S_N"]]
    i_ = prev_state[..., COMPARTMENT["I"]]
    ie = prev_state[..., COMPARTMENT["Ie"]]
    return (betaI[..., 0] * sn * i_ + betaIe[..., 0] * sn * ie) * p


if __name__ == "__main__":
    p = 0.35
    key = jax.random.PRNGKey(0)

    # Small primary check (matches module-implied shapes: [B, T, 1] / [B, T, C]).
    B, T, C = 16, 8, NUM_COMPARTMENTS
    k1, k2, k3 = jax.random.split(key, 3)
    betaI = jax.random.uniform(k1, (B, T, 1), dtype=jnp.float32)
    betaIe = jax.random.uniform(k2, (B, T, 1), dtype=jnp.float32)
    prev_state = jax.random.uniform(k3, (B, T, C), dtype=jnp.float32)

    pred = seiier_forward(betaI, betaIe, prev_state, p=p, time_step=T)
    pred = jax.block_until_ready(pred)
    ref = _reference(betaI, betaIe, prev_state, p)
    assert pred.shape == (B, T)
    assert jnp.allclose(pred, ref, atol=1e-6, rtol=1e-6)

    # Secondary check: odd sizes exercise the padding / lane-flattening path
    # and a multi-step grid.
    B2, T2 = 32, 257
    k4, k5, k6 = jax.random.split(jax.random.PRNGKey(1), 3)
    betaI2 = jax.random.uniform(k4, (B2, T2, 1), dtype=jnp.float32)
    betaIe2 = jax.random.uniform(k5, (B2, T2, 1), dtype=jnp.float32)
    prev_state2 = jax.random.uniform(k6, (B2, T2, C), dtype=jnp.float32)

    pred2 = seiier_forward(betaI2, betaIe2, prev_state2, p=p, time_step=T2)
    pred2 = jax.block_until_ready(pred2)
    ref2 = _reference(betaI2, betaIe2, prev_state2, p)
    assert pred2.shape == (B2, T2)
    assert jnp.allclose(pred2, ref2, atol=1e-6, rtol=1e-6)

    print("KERNEL_OK")
</pallas_src>

<mosaic_0001>
module attributes {stable_mosaic.version = 11 : i64} {
  func.func @_seiier_kernel(%arg0: i32, %arg1: memref<8x512xf32, #tpu.memory_space<vmem>>, %arg2: memref<8x512xf32, #tpu.memory_space<vmem>>, %arg3: memref<8x512xf32, #tpu.memory_space<vmem>>, %arg4: memref<8x512xf32, #tpu.memory_space<vmem>>, %arg5: memref<8x512xf32, #tpu.memory_space<vmem>>, %arg6: memref<8x512xf32, #tpu.memory_space<vmem>>) attributes {dimension_semantics = [#tpu.dimension_semantics<parallel>], iteration_bounds = array<i64: 1>, scalar_prefetch = 0 : i64, scratch_operands = 0 : i64, tpu.core_type = #tpu.core_type<tc>, window_params = [{transform_indices = @transform_0, window_bounds = array<i64: 8, 512>}, {transform_indices = @transform_1, window_bounds = array<i64: 8, 512>}, {transform_indices = @transform_2, window_bounds = array<i64: 8, 512>}, {transform_indices = @transform_3, window_bounds = array<i64: 8, 512>}, {transform_indices = @transform_4, window_bounds = array<i64: 8, 512>}, {transform_indices = @transform_5, window_bounds = array<i64: 8, 512>}]} {
    %c0 = arith.constant 0 : index
    %c0_0 = arith.constant 0 : index
    %0 = vector.load %arg3[%c0, %c0_0] : memref<8x512xf32, #tpu.memory_space<vmem>>, vector<8x512xf32>
    %c0_1 = arith.constant 0 : index
    %c0_2 = arith.constant 0 : index
    %1 = vector.load %arg1[%c0_1, %c0_2] : memref<8x512xf32, #tpu.memory_space<vmem>>, vector<8x512xf32>
    %c0_3 = arith.constant 0 : index
    %c0_4 = arith.constant 0 : index
    %2 = vector.load %arg4[%c0_3, %c0_4] : memref<8x512xf32, #tpu.memory_space<vmem>>, vector<8x512xf32>
    %3 = arith.mulf %1, %2 : vector<8x512xf32>
    %c0_5 = arith.constant 0 : index
    %c0_6 = arith.constant 0 : index
    %4 = vector.load %arg2[%c0_5, %c0_6] : memref<8x512xf32, #tpu.memory_space<vmem>>, vector<8x512xf32>
    %c0_7 = arith.constant 0 : index
    %c0_8 = arith.constant 0 : index
    %5 = vector.load %arg5[%c0_7, %c0_8] : memref<8x512xf32, #tpu.memory_space<vmem>>, vector<8x512xf32>
    %6 = arith.mulf %4, %5 : vector<8x512xf32>
    %7 = arith.addf %3, %6 : vector<8x512xf32>
    %8 = arith.mulf %0, %7 : vector<8x512xf32>
    %cst = arith.constant 3.500000e-01 : f32
    %9 = vector.broadcast %cst : f32 to vector<8x512xf32>
    %10 = arith.mulf %8, %9 : vector<8x512xf32>
    %c0_9 = arith.constant 0 : index
    %c0_10 = arith.constant 0 : index
    %11 = vector.load %arg6[%c0_9, %c0_10] : memref<8x512xf32, #tpu.memory_space<vmem>>, vector<8x512xf32>
    tpu.vector_store %arg6[%c0_9, %c0_10], %10 {strides = array<i32>} : memref<8x512xf32, #tpu.memory_space<vmem>>, vector<8x512xf32>,
    return
  }
  func.func @transform_0(%arg0: i32) -> (i32, i32) {
    %c0_i32 = arith.constant 0 : i32
    %c0_i32_0 = arith.constant 0 : i32
    return %arg0, %c0_i32 : i32, i32
  }
  func.func @transform_1(%arg0: i32) -> (i32, i32) {
    %c0_i32 = arith.constant 0 : i32
    %c0_i32_0 = arith.constant 0 : i32
    return %arg0, %c0_i32 : i32, i32
  }
  func.func @transform_2(%arg0: i32) -> (i32, i32) {
    %c0_i32 = arith.constant 0 : i32
    %c0_i32_0 = arith.constant 0 : i32
    return %arg0, %c0_i32 : i32, i32
  }
  func.func @transform_3(%arg0: i32) -> (i32, i32) {
    %c0_i32 = arith.constant 0 : i32
    %c0_i32_0 = arith.constant 0 : i32
    return %arg0, %c0_i32 : i32, i32
  }
  func.func @transform_4(%arg0: i32) -> (i32, i32) {
    %c0_i32 = arith.constant 0 : i32
    %c0_i32_0 = arith.constant 0 : i32
    return %arg0, %c0_i32 : i32, i32
  }
  func.func @transform_5(%arg0: i32) -> (i32, i32) {
    %c0_i32 = arith.constant 0 : i32
    %c0_i32_0 = arith.constant 0 : i32
    return %arg0, %c0_i32 : i32, i32
  }
}

</mosaic_0001>

<llo_original>
// kernel: tpu_custom_call.1
$region0: #{tpu_custom_call.1}
  #allocation0 [shape = 'u32[]', space=smem, size = 0x4, offset = 0x4, fixed_abs, tag = 'smem constant byte address 0x4 - core index']
  #allocation1 [shape = 'u32[144,128]{1,0:T(1,128)}', space=vmem, size = 0x12000, scoped, tag = 'internal scratch']
  %s0 = inlined_call_operand.hbm [shape: f32[8,512], index: 0, kind: input, shape index: {}]
  %s1 = inlined_call_operand.hbm [shape: f32[8,512], index: 1, kind: input, shape index: {}]
  %s2 = inlined_call_operand.hbm [shape: f32[8,512], index: 2, kind: input, shape index: {}]
  %s3 = inlined_call_operand.hbm [shape: f32[8,512], index: 3, kind: input, shape index: {}]
  %s4 = inlined_call_operand.hbm [shape: f32[8,512], index: 4, kind: input, shape index: {}]
  %s5 = inlined_call_operand.hbm [shape: f32[8,512], index: 5, kind: output, shape index: {}]
  %s6 = sld [smem:[#allocation0]]
  $region50: #{tpu_custom_call.1} parent=0
    _
  %s8 = ssub.s32 1, %s6
  %s9 = scalar_select 0, %s8, %s6
  $region1: #{tpu_custom_call.1} parent=0
    #allocation2 [shape = 'u8[16384]{0}', space=vmem, size = 0x4000, scoped, tag = 'input window, operand 0, single buffered']
    #allocation3 [shape = 's32[1]{0}', space=sflag, size = 0x4, scoped, tag = 'scoped memory for tpu_custom_call.1']
    #allocation4 [shape = 's32[1]{0}', space=sflag, size = 0x4, scoped, tag = 'scoped memory for tpu_custom_call.1']
    #allocation5 [shape = 'u8[16384]{0}', space=vmem, size = 0x4000, scoped, tag = 'input window, operand 1, single buffered']
    #allocation6 [shape = 's32[1]{0}', space=sflag, size = 0x4, scoped, tag = 'scoped memory for tpu_custom_call.1']
    #allocation7 [shape = 'u8[16384]{0}', space=vmem, size = 0x4000, scoped, tag = 'input window, operand 2, single buffered']
    #allocation8 [shape = 'u8[16384]{0}', space=vmem, size = 0x4000, scoped, tag = 'input window, operand 3, single buffered']
    #allocation9 [shape = 's32[1]{0}', space=sflag, size = 0x4, scoped, tag = 'scoped memory for tpu_custom_call.1']
    #allocation10 [shape = 'u8[16384]{0}', space=vmem, size = 0x4000, scoped, tag = 'input window, operand 4, single buffered']
    #allocation11 [shape = 'u8[16384]{0}', space=vmem, size = 0x4000, scoped, tag = 'output window, operand 0, single buffered']
    %10 = vsyncpa [#allocation3], 0
    %11 = vsyncpa [#allocation6], 0
    %12 = vsyncpa [#allocation9], 0
    %13 = vsyncpa [#allocation4], 0
    // Predicated region
    $region2: #{tpu_custom_call.1} parent=1 // pred_check
      _
    $region3: #{tpu_custom_call.1} parent=1 // pred_check_branch
      %15 = sbr.rel (0) target = $region5
    $region4: #{tpu_custom_call.1} parent=1 // pred_region
      %s17 = ssub.s32 512, 512
      %18 = vsyncadd [#allocation3], %s17
      %s20 = sshll.u32 [#allocation2], 4
      %s21 = int_to_ptr.vmem [resolvable:$true] %s20
      %23 = dma.hbm_to_vmem [thread:$0]  %s0, 512, %s21, [#allocation3]
    $region5: #{tpu_custom_call.1} parent=1 // pred_fallthru
      _
    // Predicated region
    $region6: #{tpu_custom_call.1} parent=1 // pred_check
      _
    $region7: #{tpu_custom_call.1} parent=1 // pred_check_branch
      %25 = sbr.rel (0) target = $region9
    $region8: #{tpu_custom_call.1} parent=1 // pred_region
      %s27 = ssub.s32 512, 512
      %28 = vsyncadd [#allocation6], %s27
      %s30 = sshll.u32 [#allocation5], 4
      %s31 = int_to_ptr.vmem [resolvable:$true] %s30
      %33 = dma.hbm_to_vmem [thread:$0]  %s1, 512, %s31, [#allocation6]
    $region9: #{tpu_custom_call.1} parent=1 // pred_fallthru
      _
    // Predicated region
    $region10: #{tpu_custom_call.1} parent=1 // pred_check
      _
    $region11: #{tpu_custom_call.1} parent=1 // pred_check_branch
      %35 = sbr.rel (0) target = $region13
    $region12: #{tpu_custom_call.1} parent=1 // pred_region
      %s37 = ssub.s32 512, 512
      %38 = vsyncadd [#allocation6], %s37
      %s40 = sshll.u32 [#allocation7], 4
      %s41 = int_to_ptr.vmem [resolvable:$true] %s40
      %43 = dma.hbm_to_vmem [thread:$0]  %s2, 512, %s41, [#allocation6]
    $region13: #{tpu_custom_call.1} parent=1 // pred_fallthru
      _
    // Predicated region
    $region14: #{tpu_custom_call.1} parent=1 // pred_check
      _
    $region15: #{tpu_custom_call.1} parent=1 // pred_check_branch
      %45 = sbr.rel (0) target = $region17
    $region16: #{tpu_custom_call.1} parent=1 // pred_region
      %s47 = ssub.s32 512, 512
      %48 = vsyncadd [#allocation9], %s47
      %s50 = sshll.u32 [#allocation8], 4
      %s51 = int_to_ptr.vmem [resolvable:$true] %s50
      %53 = dma.hbm_to_vmem [thread:$0]  %s3, 512, %s51, [#allocation9]
    $region17: #{tpu_custom_call.1} parent=1 // pred_fallthru
      _
    // Predicated region
    $region18: #{tpu_custom_call.1} parent=1 // pred_check
      _
    $region19: #{tpu_custom_call.1} parent=1 // pred_check_branch
      %55 = sbr.rel (0) target = $region21
    $region20: #{tpu_custom_call.1} parent=1 // pred_region
      %s57 = ssub.s32 512, 512
      %58 = vsyncadd [#allocation9], %s57
      %s60 = sshll.u32 [#allocation10], 4
      %s61 = int_to_ptr.vmem [resolvable:$true] %s60
      %63 = dma.hbm_to_vmem [thread:$0]  %s4, 512, %s61, [#allocation9]
    $region21: #{tpu_custom_call.1} parent=1 // pred_fallthru
      _
    // Predicated region
    $region22: #{tpu_custom_call.1} parent=1 // pred_check
      _
    $region23: #{tpu_custom_call.1} parent=1 // pred_check_branch
      %65 = sbr.rel (0) target = $region25
    $region24: #{tpu_custom_call.1} parent=1 // pred_region
      %66 = dma.done [#allocation3], 512
    $region25: #{tpu_custom_call.1} parent=1 // pred_fallthru
      _
    // Predicated region
    $region26: #{tpu_custom_call.1} parent=1 // pred_check
      _
    $region27: #{tpu_custom_call.1} parent=1 // pred_check_branch
      %68 = sbr.rel (0) target = $region29
    $region28: #{tpu_custom_call.1} parent=1 // pred_region
      %69 = dma.done [#allocation6], 512
    $region29: #{tpu_custom_call.1} parent=1 // pred_fallthru
      _
    // Predicated region
    $region30: #{tpu_custom_call.1} parent=1 // pred_check
      _
    $region31: #{tpu_custom_call.1} parent=1 // pred_check_branch
      %71 = sbr.rel (0) target = $region33
    $region32: #{tpu_custom_call.1} parent=1 // pred_region
      %72 = dma.done [#allocation6], 512
    $region33: #{tpu_custom_call.1} parent=1 // pred_fallthru
      _
    // Predicated region
    $region34: #{tpu_custom_call.1} parent=1 // pred_check
      _
    $region35: #{tpu_custom_call.1} parent=1 // pred_check_branch
      %74 = sbr.rel (0) target = $region37
    $region36: #{tpu_custom_call.1} parent=1 // pred_region
      %75 = dma.done [#allocation9], 512
    $region37: #{tpu_custom_call.1} parent=1 // pred_fallthru
      _
    // Predicated region
    $region38: #{tpu_custom_call.1} parent=1 // pred_check
      _
    $region39: #{tpu_custom_call.1} parent=1 // pred_check_branch
      %77 = sbr.rel (0) target = $region41
    $region40: #{tpu_custom_call.1} parent=1 // pred_region
      %78 = dma.done [#allocation9], 512
    $region41: #{tpu_custom_call.1} parent=1 // pred_fallthru
      _
    %v79 = vld [vmem:[#allocation7] sm:$0xff]
    %v80 = vld [vmem:[#allocation7 + $0x8] sm:$0xff]
    %v81 = vld [vmem:[#allocation7 + $0x10] sm:$0xff]
    %v82 = vld [vmem:[#allocation7 + $0x18] sm:$0xff]
    %v83 = vld [vmem:[#allocation2] sm:$0xff]
    %v84 = vld [vmem:[#allocation2 + $0x8] sm:$0xff]
    %v85 = vld [vmem:[#allocation2 + $0x10] sm:$0xff]
    %v86 = vld [vmem:[#allocation2 + $0x18] sm:$0xff]
    %v87 = vld [vmem:[#allocation8] sm:$0xff]
    %v88 = vld [vmem:[#allocation8 + $0x8] sm:$0xff]
    %v89 = vld [vmem:[#allocation8 + $0x10] sm:$0xff]
    %v90 = vld [vmem:[#allocation8 + $0x18] sm:$0xff]
    %v91 = vmul.f32 %v83, %v87
    %v92 = vmul.f32 %v84, %v88
    %v93 = vmul.f32 %v85, %v89
    %v94 = vmul.f32 %v86, %v90
    %v95 = vld [vmem:[#allocation5] sm:$0xff]
    %v96 = vld [vmem:[#allocation5 + $0x8] sm:$0xff]
    %v97 = vld [vmem:[#allocation5 + $0x10] sm:$0xff]
    %v98 = vld [vmem:[#allocation5 + $0x18] sm:$0xff]
    %v99 = vld [vmem:[#allocation10] sm:$0xff]
    %v100 = vld [vmem:[#allocation10 + $0x8] sm:$0xff]
    %v101 = vld [vmem:[#allocation10 + $0x10] sm:$0xff]
    %v102 = vld [vmem:[#allocation10 + $0x18] sm:$0xff]
    %v103 = vmul.f32 %v95, %v99
    %v104 = vmul.f32 %v96, %v100
    %v105 = vmul.f32 %v97, %v101
    %v106 = vmul.f32 %v98, %v102
    %v107 = vadd.f32 %v91, %v103
    %v108 = vadd.f32 %v92, %v104
    %v109 = vadd.f32 %v93, %v105
    %v110 = vadd.f32 %v94, %v106
    %v111 = vmul.f32 %v79, %v107
    %v112 = vmul.f32 %v80, %v108
    %v113 = vmul.f32 %v81, %v109
    %v114 = vmul.f32 %v82, %v110
    %v115 = vmul.f32 %v111, 0.35
    %v116 = vmul.f32 %v112, 0.35
    %v117 = vmul.f32 %v113, 0.35
    %v118 = vmul.f32 %v114, 0.35
    %119 = vst [vmem:[#allocation11] sm:$0xff] %v115
    %120 = vst [vmem:[#allocation11 + $0x8] sm:$0xff] %v116
    %121 = vst [vmem:[#allocation11 + $0x10] sm:$0xff] %v117
    %122 = vst [vmem:[#allocation11 + $0x18] sm:$0xff] %v118
    // Predicated region
    $region42: #{tpu_custom_call.1} parent=1 // pred_check
      _
    $region43: #{tpu_custom_call.1} parent=1 // pred_check_branch
      %124 = sbr.rel (0) target = $region45
    $region44: #{tpu_custom_call.1} parent=1 // pred_region
      %s126 = ssub.s32 512, 512
      %127 = vsyncadd [#allocation4], %s126
      %s129 = sshll.u32 [#allocation11], 4
      %s130 = int_to_ptr.vmem [resolvable:$true] %s129
      %132 = dma.vmem_to_hbm [thread:$0]  %s130, 512, %s5, [#allocation4]
    $region45: #{tpu_custom_call.1} parent=1 // pred_fallthru
      _
    // Predicated region
    $region46: #{tpu_custom_call.1} parent=1 // pred_check
      _
    $region47: #{tpu_custom_call.1} parent=1 // pred_check_branch
      %134 = sbr.rel (0) target = $region49
    $region48: #{tpu_custom_call.1} parent=1 // pred_region
      %135 = dma.done [#allocation4], 512
    $region49: #{tpu_custom_call.1} parent=1 // pred_fallthru
      _
    %136 = vsyncpa [#allocation3], 1
    %137 = vsyncpa [#allocation6], 1
    %138 = vsyncpa [#allocation9], 1
    %139 = vsyncpa [#allocation4], 1

</llo_original>
